<compile_context>
chip_gen: v5e
topology: v5e:2x2
jax: 0.10.0
libtpu: 0.0.40
codegen_flags: <defaults>
</compile_context>

<pallas_src>
import jax
import jax.numpy as jnp
from jax.experimental import pallas as pl
from jax.experimental.pallas import tpu as pltpu

UA_VOCAB, UA_DIM = 100, 16
GEO_VOCAB, GEO_DIM = 50, 8
METHOD_VOCAB, METHOD_DIM = 5, 4
TOTAL_VOCAB = UA_VOCAB + GEO_VOCAB + METHOD_VOCAB      # 155
OUT_DIM = UA_DIM + GEO_DIM + METHOD_DIM                # 28


def categorical_embedder_kernel(ids_ref, tab_ref, o_ref):
    # ids_ref : (3, tb) int32, already offset into the combined 155-vocab
    # tab_ref : (28, 155) transposed block-diagonal table (VMEM-resident)
    # o_ref   : (28, tb)  concatenated embeddings, batch on the lane axis
    tb = o_ref.shape[1]
    ids = ids_ref[...]                                           # (3, tb)
    # 2-D iota over the combined vocab on the SUBLANE axis (155 -> 160 pad).
    row = jax.lax.broadcasted_iota(jnp.int32, (TOTAL_VOCAB, tb), 0)
    hot = ((row == ids[0:1, :]) |
           (row == ids[1:2, :]) |
           (row == ids[2:3, :])).astype(tab_ref.dtype)           # (155, tb)
    # One MXU matmul produces the concat of all three embedding lookups.
    o_ref[...] = jnp.dot(tab_ref[...], hot,
                         preferred_element_type=jnp.float32).astype(o_ref.dtype)


def build_combined_table_t(ua_tab, geo_tab, method_tab):
    """Transposed block-diagonal table (28, 155): concat-by-construction.

    Depends only on parameters -- build it ONCE and reuse across calls.
    """
    tab = jnp.zeros((TOTAL_VOCAB, OUT_DIM), dtype=ua_tab.dtype)
    tab = tab.at[:UA_VOCAB, :UA_DIM].set(ua_tab)
    tab = tab.at[UA_VOCAB:UA_VOCAB + GEO_VOCAB,
                 UA_DIM:UA_DIM + GEO_DIM].set(geo_tab)
    tab = tab.at[UA_VOCAB + GEO_VOCAB:,
                 UA_DIM + GEO_DIM:].set(method_tab)
    return tab.T                                                 # (28, 155)


def _choose_tile(B, tb):
    """Lane-dense batch tile; keep >=2 grid steps when possible (v7x: 2 TCs)."""
    if B <= 128:
        return B                       # single step; block dims == array dims
    tb = min(tb, B)
    if tb == B:                        # whole batch would fit in one step
        tb = max(128, (B // 2) // 128 * 128)
    else:
        tb = max(128, tb // 128 * 128)
    return tb


def categorical_embedder_pallas(ua_id, geo_id, method_id, tab_t, *, tb=2048):
    """ids: (B,) int each; tab_t: (28, 155) combined table -> (B, 28)."""
    B = ua_id.shape[0]
    tb = _choose_tile(B, tb)

    # Pack the three id vectors into ONE lane-dense (3, B) block, offset into
    # the combined vocab, clamped so bad ids never read another table's rows.
    ua = jnp.clip(ua_id.astype(jnp.int32), 0, UA_VOCAB - 1)
    geo = jnp.clip(geo_id.astype(jnp.int32), 0, GEO_VOCAB - 1) + UA_VOCAB
    mth = (jnp.clip(method_id.astype(jnp.int32), 0, METHOD_VOCAB - 1)
           + UA_VOCAB + GEO_VOCAB)
    ids = jnp.stack([ua, geo, mth], axis=0)                      # (3, B)

    out_t = pl.pallas_call(
        categorical_embedder_kernel,
        out_shape=jax.ShapeDtypeStruct((OUT_DIM, B), tab_t.dtype),
        grid=(pl.cdiv(B, tb),),
        in_specs=[
            pl.BlockSpec((3, tb), lambda i: (0, i)),                 # ids
            pl.BlockSpec((OUT_DIM, TOTAL_VOCAB), lambda i: (0, 0)),  # table
        ],
        out_specs=pl.BlockSpec((OUT_DIM, tb), lambda i: (0, i)),
        compiler_params=pltpu.CompilerParams(
            dimension_semantics=("parallel",)),   # v7x: shard batch over 2 TCs
    )(ids, tab_t)
    return out_t.T                                               # (B, 28)


def reference(ua_id, geo_id, method_id, ua_tab, geo_tab, method_tab):
    """Pure-XLA gather + concat (exact PyTorch semantics)."""
    return jnp.concatenate(
        [ua_tab[ua_id], geo_tab[geo_id], method_tab[method_id]], axis=-1)


def categorical_embedder(ua_id, geo_id, method_id,
                         ua_tab, geo_tab, method_tab,
                         *, tab_t=None, tb=2048, min_pallas_batch=512):
    """Dispatching entry point: XLA path for tiny batches, Pallas otherwise."""
    if ua_id.shape[0] < min_pallas_batch:
        return reference(ua_id, geo_id, method_id, ua_tab, geo_tab, method_tab)
    if tab_t is None:
        tab_t = build_combined_table_t(ua_tab, geo_tab, method_tab)
    return categorical_embedder_pallas(ua_id, geo_id, method_id, tab_t, tb=tb)


if __name__ == "__main__":
    key = jax.random.PRNGKey(0)
    k1, k2, k3 = jax.random.split(key, 3)

    ua_tab = jax.random.normal(k1, (UA_VOCAB, UA_DIM), dtype=jnp.float32)
    geo_tab = jax.random.normal(k2, (GEO_VOCAB, GEO_DIM), dtype=jnp.float32)
    method_tab = jax.random.normal(k3, (METHOD_VOCAB, METHOD_DIM),
                                   dtype=jnp.float32)

    # Hoisted out of the per-call path: built once, reused for every forward.
    tab_t = build_combined_table_t(ua_tab, geo_tab, method_tab)

    # B=8: single-step grid (module's typical tiny batch).
    # B=384: multi-step grid (tb=128, 3 steps, partial last block).
    for B in (8, 384):
        kb = jax.random.fold_in(key, B)
        ka, kg, km = jax.random.split(kb, 3)
        ua_id = jax.random.randint(ka, (B,), 0, UA_VOCAB, dtype=jnp.int32)
        geo_id = jax.random.randint(kg, (B,), 0, GEO_VOCAB, dtype=jnp.int32)
        method_id = jax.random.randint(km, (B,), 0, METHOD_VOCAB,
                                       dtype=jnp.int32)

        out = categorical_embedder_pallas(ua_id, geo_id, method_id, tab_t)
        out = jax.block_until_ready(out)

        ref = reference(ua_id, geo_id, method_id, ua_tab, geo_tab, method_tab)
        assert out.shape == (B, OUT_DIM), out.shape
        assert jnp.allclose(out, ref, atol=1e-6, rtol=1e-6)

    print("KERNEL_OK")
</pallas_src>

<mosaic_0001>
module attributes {stable_mosaic.version = 11 : i64} {
  func.func @categorical_embedder_kernel(%arg0: i32, %arg1: memref<3x8xi32, #tpu.memory_space<vmem>>, %arg2: memref<28x155xf32, #tpu.memory_space<vmem>>, %arg3: memref<28x8xf32, #tpu.memory_space<vmem>>) attributes {dimension_semantics = [#tpu.dimension_semantics<parallel>], iteration_bounds = array<i64: 1>, scalar_prefetch = 0 : i64, scratch_operands = 0 : i64, tpu.core_type = #tpu.core_type<tc>, window_params = [{transform_indices = @transform_0, window_bounds = array<i64: 3, 8>}, {pipeline_mode = #tpu.pipeline_mode<synchronous>, transform_indices = @transform_1, window_bounds = array<i64: 28, 155>}, {transform_indices = @transform_2, window_bounds = array<i64: 28, 8>}]} {
    %c0 = arith.constant 0 : index
    %c0_0 = arith.constant 0 : index
    %0 = vector.load %arg1[%c0, %c0_0] : memref<3x8xi32, #tpu.memory_space<vmem>>, vector<3x8xi32>
    %1 = tpu.iota {dimensions = array<i32: 0>} : vector<155x8xi32>
    %2 = vector.extract_strided_slice %0 {offsets = [0, 0], sizes = [1, 8], strides = [1, 1]} : vector<3x8xi32> to vector<1x8xi32>
    %3 = vector.broadcast %2 : vector<1x8xi32> to vector<155x8xi32>
    %4 = arith.cmpi eq, %1, %3 : vector<155x8xi32>
    %5 = vector.extract_strided_slice %0 {offsets = [1, 0], sizes = [1, 8], strides = [1, 1]} : vector<3x8xi32> to vector<1x8xi32>
    %6 = vector.broadcast %5 : vector<1x8xi32> to vector<155x8xi32>
    %7 = arith.cmpi eq, %1, %6 : vector<155x8xi32>
    %8 = arith.ori %4, %7 : vector<155x8xi1>
    %9 = vector.extract_strided_slice %0 {offsets = [2, 0], sizes = [1, 8], strides = [1, 1]} : vector<3x8xi32> to vector<1x8xi32>
    %10 = vector.broadcast %9 : vector<1x8xi32> to vector<155x8xi32>
    %11 = arith.cmpi eq, %1, %10 : vector<155x8xi32>
    %12 = arith.ori %8, %11 : vector<155x8xi1>
    %13 = arith.extui %12 : vector<155x8xi1> to vector<155x8xi32>
    %14 = arith.sitofp %13 : vector<155x8xi32> to vector<155x8xf32>
    %c0_1 = arith.constant 0 : index
    %c0_2 = arith.constant 0 : index
    %15 = vector.load %arg2[%c0_1, %c0_2] : memref<28x155xf32, #tpu.memory_space<vmem>>, vector<28x155xf32>
    %cst = arith.constant dense<0.000000e+00> : vector<28x8xf32>
    %16 = tpu.matmul %15, %14, %cst {dimension_numbers = #tpu.dot_dimension_numbers<[1], [0], [0], [1], [0, 0, 1, 1], [], []>} : vector<28x155xf32>, vector<155x8xf32>, vector<28x8xf32> -> vector<28x8xf32>
    %c0_3 = arith.constant 0 : index
    %c0_4 = arith.constant 0 : index
    %17 = vector.load %arg3[%c0_3, %c0_4] : memref<28x8xf32, #tpu.memory_space<vmem>>, vector<28x8xf32>
    tpu.vector_store %arg3[%c0_3, %c0_4], %16 {strides = array<i32>} : memref<28x8xf32, #tpu.memory_space<vmem>>, vector<28x8xf32>,
    return
  }
  func.func @transform_0(%arg0: i32) -> (i32, i32) {
    %c0_i32 = arith.constant 0 : i32
    %c0_i32_0 = arith.constant 0 : i32
    return %c0_i32, %arg0 : i32, i32
  }
  func.func @transform_1(%arg0: i32) -> (i32, i32) {
    %c0_i32 = arith.constant 0 : i32
    %c0_i32_0 = arith.constant 0 : i32
    %c0_i32_1 = arith.constant 0 : i32
    return %c0_i32, %c0_i32_0 : i32, i32
  }
  func.func @transform_2(%arg0: i32) -> (i32, i32) {
    %c0_i32 = arith.constant 0 : i32
    %c0_i32_0 = arith.constant 0 : i32
    return %c0_i32, %arg0 : i32, i32
  }
}

</mosaic_0001>

<llo_original>
// kernel: tpu_custom_call.1
$region0: #{tpu_custom_call.1}
  #allocation0 [shape = 'u32[]', space=smem, size = 0x4, offset = 0x4, fixed_abs, tag = 'smem constant byte address 0x4 - core index']
  #allocation1 [shape = 'u32[72,128]{1,0:T(1,128)}', space=vmem, size = 0x9000, scoped, tag = 'internal scratch']
  %s0 = inlined_call_operand.hbm [shape: s32[3,8], index: 0, kind: input, shape index: {}]
  %s1 = inlined_call_operand.hbm [shape: f32[28,155], index: 1, kind: input, shape index: {}]
  %s2 = inlined_call_operand.vmem [shape: f32[28,8], index: 2, kind: output, shape index: {}]
  %s3 = sld [smem:[#allocation0]]
  $region26: #{tpu_custom_call.1} parent=0
    _
  %s5 = ssub.s32 1, %s3
  %s6 = scalar_select 0, %s5, %s3
  $region1: #{tpu_custom_call.1} parent=0
    #allocation2 [shape = 'u8[2048]{0}', space=vmem, size = 0x800, scoped, tag = 'input window, operand 0, single buffered']
    #allocation3 [shape = 's32[1]{0}', space=sflag, size = 0x4, scoped, tag = 'scoped memory for tpu_custom_call.1']
    #allocation4 [shape = 'u8[32768]{0}', space=vmem, size = 0x8000, scoped, tag = 'input window, operand 1, single buffered']
    #allocation5 [shape = 's32[1]{0}', space=sflag, size = 0x4, scoped, tag = 'scoped memory for tpu_custom_call.1']
    %7 = vsyncpa [#allocation3], 0
    %8 = vsyncpa [#allocation5], 0
    // Predicated region
    $region2: #{tpu_custom_call.1} parent=1 // pred_check
      _
    $region3: #{tpu_custom_call.1} parent=1 // pred_check_branch
      %10 = sbr.rel (0) target = $region5
    $region4: #{tpu_custom_call.1} parent=1 // pred_region
      %12 = vsyncadd [#allocation3], 0
      %s14 = sshll.u32 %s0, 4
      %s15 = int_to_ptr.hbm [resolvable:$true] %s14
      %s16 = sshll.u32 [#allocation2], 4
      %s17 = int_to_ptr.vmem [resolvable:$true] %s16
      %19 = dma.hbm_to_vmem [thread:$0]  %s15, 64, %s17, [#allocation3]
    $region5: #{tpu_custom_call.1} parent=1 // pred_fallthru
      _
    // Predicated region
    $region6: #{tpu_custom_call.1} parent=1 // pred_check
      _
    $region7: #{tpu_custom_call.1} parent=1 // pred_check_branch
      %21 = sbr.rel (0) target = $region9
    $region8: #{tpu_custom_call.1} parent=1 // pred_region
      %23 = vsyncadd [#allocation5], 0
      %s24 = sshll.u32 %s1, 4
      %s25 = int_to_ptr.hbm [resolvable:$true] %s24
      %s26 = sshll.u32 [#allocation4], 4
      %s27 = int_to_ptr.vmem [resolvable:$true] %s26
      %32 = dma.hbm_to_vmem [thread:$0]  %s25, 1024, %s27, [#allocation5], 256, 256, 16
    $region9: #{tpu_custom_call.1} parent=1 // pred_fallthru
      _
    // Predicated region
    $region10: #{tpu_custom_call.1} parent=1 // pred_check
      _
    $region11: #{tpu_custom_call.1} parent=1 // pred_check_branch
      %34 = sbr.rel (0) target = $region13
    $region12: #{tpu_custom_call.1} parent=1 // pred_region
      %36 = dma.done [#allocation3], 64
    $region13: #{tpu_custom_call.1} parent=1 // pred_fallthru
      _
    // Predicated region
    $region14: #{tpu_custom_call.1} parent=1 // pred_check
      _
    $region15: #{tpu_custom_call.1} parent=1 // pred_check_branch
      %38 = sbr.rel (0) target = $region17
    $region16: #{tpu_custom_call.1} parent=1 // pred_region
      %40 = dma.done [#allocation5], 1024
    $region17: #{tpu_custom_call.1} parent=1 // pred_fallthru
      _
    %v41 = vld [vmem:[#allocation2] sm:$0x7]
    %v42 = vlaneseq
    %v43 = vshrl.u32 %v42, 7
    %v44 = vadd.s32 %v43, 8
    %v45 = vadd.s32 %v43, 16
    %v46 = vadd.s32 %v43, 24
    %v47 = vadd.s32 %v43, 32
    %v48 = vadd.s32 %v43, 40
    %v49 = vadd.s32 %v43, 48
    %v50 = vadd.s32 %v43, 56
    %v51 = vadd.s32 %v43, 64
    %v52 = vadd.s32 %v43, 72
    %v53 = vadd.s32 %v43, 80
    %v54 = vadd.s32 %v43, 88
    %v55 = vadd.s32 %v43, 96
    %v56 = vadd.s32 %v43, 104
    %v57 = vadd.s32 %v43, 112
    %v58 = vadd.s32 %v43, 120
    %v59 = vadd.s32 %v43, 128
    %v60 = vadd.s32 %v43, 136
    %v61 = vadd.s32 %v43, 144
    %v62 = vadd.s32 %v43, 152
    %v63 = vperm.slane %v41, 0
    %vm64 = vcmp.eq.s32.totalorder %v43, %v63
    %vm65 = vcmp.eq.s32.totalorder %v44, %v63
    %vm66 = vcmp.eq.s32.totalorder %v45, %v63
    %vm67 = vcmp.eq.s32.totalorder %v46, %v63
    %vm68 = vcmp.eq.s32.totalorder %v47, %v63
    %vm69 = vcmp.eq.s32.totalorder %v48, %v63
    %vm70 = vcmp.eq.s32.totalorder %v49, %v63
    %vm71 = vcmp.eq.s32.totalorder %v50, %v63
    %vm72 = vcmp.eq.s32.totalorder %v51, %v63
    %vm73 = vcmp.eq.s32.totalorder %v52, %v63
    %vm74 = vcmp.eq.s32.totalorder %v53, %v63
    %vm75 = vcmp.eq.s32.totalorder %v54, %v63
    %vm76 = vcmp.eq.s32.totalorder %v55, %v63
    %vm77 = vcmp.eq.s32.totalorder %v56, %v63
    %vm78 = vcmp.eq.s32.totalorder %v57, %v63
    %vm79 = vcmp.eq.s32.totalorder %v58, %v63
    %vm80 = vcmp.eq.s32.totalorder %v59, %v63
    %vm81 = vcmp.eq.s32.totalorder %v60, %v63
    %vm82 = vcmp.eq.s32.totalorder %v61, %v63
    %vm83 = vcmp.eq.s32.totalorder %v62, %v63
    %v84 = vperm.slane %v41, 1
    %vm85 = vcmp.eq.s32.totalorder %v43, %v84
    %vm86 = vcmp.eq.s32.totalorder %v44, %v84
    %vm87 = vcmp.eq.s32.totalorder %v45, %v84
    %vm88 = vcmp.eq.s32.totalorder %v46, %v84
    %vm89 = vcmp.eq.s32.totalorder %v47, %v84
    %vm90 = vcmp.eq.s32.totalorder %v48, %v84
    %vm91 = vcmp.eq.s32.totalorder %v49, %v84
    %vm92 = vcmp.eq.s32.totalorder %v50, %v84
    %vm93 = vcmp.eq.s32.totalorder %v51, %v84
    %vm94 = vcmp.eq.s32.totalorder %v52, %v84
    %vm95 = vcmp.eq.s32.totalorder %v53, %v84
    %vm96 = vcmp.eq.s32.totalorder %v54, %v84
    %vm97 = vcmp.eq.s32.totalorder %v55, %v84
    %vm98 = vcmp.eq.s32.totalorder %v56, %v84
    %vm99 = vcmp.eq.s32.totalorder %v57, %v84
    %vm100 = vcmp.eq.s32.totalorder %v58, %v84
    %vm101 = vcmp.eq.s32.totalorder %v59, %v84
    %vm102 = vcmp.eq.s32.totalorder %v60, %v84
    %vm103 = vcmp.eq.s32.totalorder %v61, %v84
    %vm104 = vcmp.eq.s32.totalorder %v62, %v84
    %vm105 = vmor %vm64, %vm85
    %vm106 = vmor %vm65, %vm86
    %vm107 = vmor %vm66, %vm87
    %vm108 = vmor %vm67, %vm88
    %vm109 = vmor %vm68, %vm89
    %vm110 = vmor %vm69, %vm90
    %vm111 = vmor %vm70, %vm91
    %vm112 = vmor %vm71, %vm92
    %vm113 = vmor %vm72, %vm93
    %vm114 = vmor %vm73, %vm94
    %vm115 = vmor %vm74, %vm95
    %vm116 = vmor %vm75, %vm96
    %vm117 = vmor %vm76, %vm97
    %vm118 = vmor %vm77, %vm98
    %vm119 = vmor %vm78, %vm99
    %vm120 = vmor %vm79, %vm100
    %vm121 = vmor %vm80, %vm101
    %vm122 = vmor %vm81, %vm102
    %vm123 = vmor %vm82, %vm103
    %vm124 = vmor %vm83, %vm104
    %v125 = vperm.slane %v41, 2
    %vm126 = vcmp.eq.s32.totalorder %v43, %v125
    %vm127 = vcmp.eq.s32.totalorder %v44, %v125
    %vm128 = vcmp.eq.s32.totalorder %v45, %v125
    %vm129 = vcmp.eq.s32.totalorder %v46, %v125
    %vm130 = vcmp.eq.s32.totalorder %v47, %v125
    %vm131 = vcmp.eq.s32.totalorder %v48, %v125
    %vm132 = vcmp.eq.s32.totalorder %v49, %v125
    %vm133 = vcmp.eq.s32.totalorder %v50, %v125
    %vm134 = vcmp.eq.s32.totalorder %v51, %v125
    %vm135 = vcmp.eq.s32.totalorder %v52, %v125
    %vm136 = vcmp.eq.s32.totalorder %v53, %v125
    %vm137 = vcmp.eq.s32.totalorder %v54, %v125
    %vm138 = vcmp.eq.s32.totalorder %v55, %v125
    %vm139 = vcmp.eq.s32.totalorder %v56, %v125
    %vm140 = vcmp.eq.s32.totalorder %v57, %v125
    %vm141 = vcmp.eq.s32.totalorder %v58, %v125
    %vm142 = vcmp.eq.s32.totalorder %v59, %v125
    %vm143 = vcmp.eq.s32.totalorder %v60, %v125
    %vm144 = vcmp.eq.s32.totalorder %v61, %v125
    %vm145 = vcmp.eq.s32.totalorder %v62, %v125
    %vm146 = vmor %vm105, %vm126
    %vm147 = vmor %vm106, %vm127
    %vm148 = vmor %vm107, %vm128
    %vm149 = vmor %vm108, %vm129
    %vm150 = vmor %vm109, %vm130
    %vm151 = vmor %vm110, %vm131
    %vm152 = vmor %vm111, %vm132
    %vm153 = vmor %vm112, %vm133
    %vm154 = vmor %vm113, %vm134
    %vm155 = vmor %vm114, %vm135
    %vm156 = vmor %vm115, %vm136
    %vm157 = vmor %vm116, %vm137
    %vm158 = vmor %vm117, %vm138
    %vm159 = vmor %vm118, %vm139
    %vm160 = vmor %vm119, %vm140
    %vm161 = vmor %vm120, %vm141
    %vm162 = vmor %vm121, %vm142
    %vm163 = vmor %vm122, %vm143
    %vm164 = vmor %vm123, %vm144
    %vm165 = vmor %vm124, %vm145
    %v166 = vsel %vm146, 1, 0
    %v167 = vsel %vm147, 1, 0
    %v168 = vsel %vm148, 1, 0
    %v169 = vsel %vm149, 1, 0
    %v170 = vsel %vm150, 1, 0
    %v171 = vsel %vm151, 1, 0
    %v172 = vsel %vm152, 1, 0
    %v173 = vsel %vm153, 1, 0
    %v174 = vsel %vm154, 1, 0
    %v175 = vsel %vm155, 1, 0
    %v176 = vsel %vm156, 1, 0
    %v177 = vsel %vm157, 1, 0
    %v178 = vsel %vm158, 1, 0
    %v179 = vsel %vm159, 1, 0
    %v180 = vsel %vm160, 1, 0
    %v181 = vsel %vm161, 1, 0
    %v182 = vsel %vm162, 1, 0
    %v183 = vsel %vm163, 1, 0
    %v184 = vsel %vm164, 1, 0
    %v185 = vsel %vm165, 1, 0
    %v186 = vcvt.s32.f32 %v166
    %v187 = vcvt.s32.f32 %v167
    %v188 = vcvt.s32.f32 %v168
    %v189 = vcvt.s32.f32 %v169
    %v190 = vcvt.s32.f32 %v170
    %v191 = vcvt.s32.f32 %v171
    %v192 = vcvt.s32.f32 %v172
    %v193 = vcvt.s32.f32 %v173
    %v194 = vcvt.s32.f32 %v174
    %v195 = vcvt.s32.f32 %v175
    %v196 = vcvt.s32.f32 %v176
    %v197 = vcvt.s32.f32 %v177
    %v198 = vcvt.s32.f32 %v178
    %v199 = vcvt.s32.f32 %v179
    %v200 = vcvt.s32.f32 %v180
    %v201 = vcvt.s32.f32 %v181
    %v202 = vcvt.s32.f32 %v182
    %v203 = vcvt.s32.f32 %v183
    %v204 = vcvt.s32.f32 %v184
    %v205 = vcvt.s32.f32 %v185
    %v206 = vld [vmem:[#allocation4] sm:$0xff]
    %v207 = vld [vmem:[#allocation4 + $0x8] sm:$0xff]
    %v208 = vld [vmem:[#allocation4 + $0x10] sm:$0xff]
    %v209 = vld [vmem:[#allocation4 + $0x18] sm:$0xff]
    %v210 = vld [vmem:[#allocation4 + $0x20] sm:$0xff]
    %v211 = vld [vmem:[#allocation4 + $0x28] sm:$0xff]
    %v212 = vld [vmem:[#allocation4 + $0x30] sm:$0xf]
    %v213 = vld [vmem:[#allocation4 + $0x38] sm:$0xf]
    %vm214 = vcmask 220160
    %v216 = vsel %vm214, %v207, 0
    %v219 = vsel %vm214, %v209, 0
    %v222 = vsel %vm214, %v211, 0
    %v225 = vsel %vm214, %v213, 0
    %vm227 = vcmask 1042432
    %v229 = vsel %vm227, %v205, 0
    %231 = vmatpush.msra.mxu0 %v201
    %232 = vmatpush.msra.mxu0 %v200
    %233 = vmatpush.msra.mxu0 %v199
    %234 = vmatpush.msra.mxu0 %v198
    %235 = vmatpush.msra.mxu0 %v197
    %236 = vmatpush.msra.mxu0 %v196
    %237 = vmatpush.msra.mxu0 %v195
    %238 = vmatpush.msra.mxu0 %v194
    %239 = vmatpush.msra.mxu0 %v193
    %240 = vmatpush.msra.mxu0 %v192
    %241 = vmatpush.msra.mxu0 %v191
    %242 = vmatpush.msra.mxu0 %v190
    %243 = vmatpush.msra.mxu0 %v189
    %244 = vmatpush.msra.mxu0 %v188
    %245 = vmatpush.msra.mxu0 %v187
    %246 = vmatpush.msra.mxu0 %v186
    %247 = vmatmul.f32.gmra.mxu0 %v206
    %v248 = vpop.f32.mrf.mxu0
    %v249 = vadd.f32 0.0, %v248
    %250 = vmatmul.f32.gmra.mxu0 %v208
    %v251 = vpop.f32.mrf.mxu0
    %v252 = vadd.f32 0.0, %v251
    %253 = vmatmul.f32.gmra.mxu0 %v210
    %v254 = vpop.f32.mrf.mxu0
    %v255 = vadd.f32 0.0, %v254
    %256 = vmatmul.f32.gmra.mxu0 %v212
    %v257 = vpop.f32.mrf.mxu0
    %v258 = vadd.f32 0.0, %v257
    %259 = vdwg.mxu0
    %260 = vmatpush.msra.mxu0 0.0
    %261 = vmatpush.msra.mxu0 0.0
    %262 = vmatpush.msra.mxu0 0.0
    %263 = vmatpush.msra.mxu0 0.0
    %264 = vmatpush.msra.mxu0 0.0
    %265 = vmatpush.msra.mxu0 0.0
    %266 = vmatpush.msra.mxu0 0.0
    %267 = vmatpush.msra.mxu0 0.0
    %268 = vmatpush.msra.mxu0 0.0
    %269 = vmatpush.msra.mxu0 0.0
    %270 = vmatpush.msra.mxu0 0.0
    %271 = vmatpush.msra.mxu0 0.0
    %272 = vmatpush.msra.mxu0 %v229
    %273 = vmatpush.msra.mxu0 %v204
    %274 = vmatpush.msra.mxu0 %v203
    %275 = vmatpush.msra.mxu0 %v202
    %276 = vmatmul.f32.gmra.mxu0 %v216
    %v277 = vpop.f32.mrf.mxu0
    %v278 = vadd.f32 %v249, %v277
    %279 = vmatmul.f32.gmra.mxu0 %v219
    %v280 = vpop.f32.mrf.mxu0
    %v281 = vadd.f32 %v252, %v280
    %282 = vmatmul.f32.gmra.mxu0 %v222
    %v283 = vpop.f32.mrf.mxu0
    %v284 = vadd.f32 %v255, %v283
    %285 = vmatmul.f32.gmra.mxu0 %v225
    %v286 = vpop.f32.mrf.mxu0
    %v287 = vadd.f32 %v258, %v286
    %288 = vdwg.mxu0
    %vm289 = vcmask 64512
    %290 = vst.msk [vmem:[%s2] sm:$0xff] %vm289, %v278
    %291 = vst.msk [vmem:[%s2 + $0x8] sm:$0xff] %vm289, %v281
    %292 = vst.msk [vmem:[%s2 + $0x10] sm:$0xff] %vm289, %v284
    %vm293 = vcmask 60416
    %294 = vst.msk [vmem:[%s2 + $0x18] sm:$0xf] %vm293, %v287
    // Predicated region
    $region18: #{tpu_custom_call.1} parent=1 // pred_check
      _
    $region19: #{tpu_custom_call.1} parent=1 // pred_check_branch
      %296 = sbr.rel (0) target = $region21
    $region20: #{tpu_custom_call.1} parent=1 // pred_region
      _
    $region21: #{tpu_custom_call.1} parent=1 // pred_fallthru
      _
    // Predicated region
    $region22: #{tpu_custom_call.1} parent=1 // pred_check
      _
    $region23: #{tpu_custom_call.1} parent=1 // pred_check_branch
      %298 = sbr.rel (0) target = $region25
    $region24: #{tpu_custom_call.1} parent=1 // pred_region
      _
    $region25: #{tpu_custom_call.1} parent=1 // pred_fallthru
      _
    %299 = vsyncpa [#allocation3], 1
    %300 = vsyncpa [#allocation5], 1

</llo_original>
